<compile_context>
chip_gen: v7x
topology: tpu7x:2x2x1
jax: 0.10.0
libtpu: 0.0.40
codegen_flags: <defaults>
</compile_context>

<pallas_src>
import functools

import jax
import jax.numpy as jnp
from jax import lax
from jax.experimental import pallas as pl
from jax.experimental.pallas import tpu as pltpu


_A_SCALE = 127.0           # A_hat entries lie in [0, 1] -> scale-free int8 quant
_A_INV_SCALE = 1.0 / _A_SCALE
_XW_RESIDENT_BYTES = 8 * 1024 * 1024   # keep XW resident in VMEM below this (x2 buffers)


# ----------------------------------------------------------------------------
# planning helpers
# ----------------------------------------------------------------------------
def _round_up(x, m):
    return (x + m - 1) // m * m


def _vmem_limit_bytes():
    """Per-generation VMEM budget: ~48 MiB on 64 MiB v7x, 96 MiB on 128 MiB parts."""
    cap = 64 * 1024 * 1024
    try:
        cap = int(pltpu.get_tpu_info().vmem_capacity_bytes)
    except Exception:
        pass
    return int(min(cap * 3 // 4, 96 * 1024 * 1024))


def _plan_tiles(n):
    """Node-dim padding + aggregation tile sizes.

    Big tiles (target 1024) keep the ~0.35 us per-grid-step overhead well below
    the A_hat tile DMA time; the node dim is padded to a tile multiple so the
    plan never degrades to 128-wide tiles.  tm is capped so the "parallel" row
    axis keeps >=2 tiles (v7x megacore) whenever the graph is big enough.
    """
    target = 1024
    t = target
    while t > 128 and _round_up(n, 128) < t:
        t //= 2
    n_pad = _round_up(n, t)
    tk = t
    tm = t
    if n_pad // tm < 2 and n_pad >= 256:
        tm = n_pad // 2
    return n_pad, tm, tk


# ----------------------------------------------------------------------------
# kernel 1: XW = X @ W  (tiled over node rows, channels kept whole)
# ----------------------------------------------------------------------------
def _xw_kernel(x_ref, w_ref, o_ref):
    o_ref[...] = jnp.dot(x_ref[...], w_ref[...],
                         preferred_element_type=jnp.float32).astype(o_ref.dtype)


def _matmul_xw(x_pad, w_pad, *, tm, vmem_limit):
    n_pad, fin_pad = x_pad.shape
    fout_pad = w_pad.shape[1]
    # TODO(synk): for very large fin (>~8k) tile the K dimension with a
    # reduction grid axis + f32 scratch to stay within v7x's 64 MiB VMEM.
    return pl.pallas_call(
        _xw_kernel,
        out_shape=jax.ShapeDtypeStruct((n_pad, fout_pad), jnp.bfloat16),
        grid=(n_pad // tm,),
        in_specs=[
            pl.BlockSpec((tm, fin_pad), lambda i: (i, 0)),        # X row tile
            pl.BlockSpec((fin_pad, fout_pad), lambda i: (0, 0)),  # W (whole)
        ],
        out_specs=pl.BlockSpec((tm, fout_pad), lambda i: (i, 0)),
        compiler_params=pltpu.CompilerParams(
            dimension_semantics=("parallel",),
            vmem_limit_bytes=vmem_limit,
        ),
    )(x_pad, w_pad)


# ----------------------------------------------------------------------------
# aggregation kernels: acc += A_hat_tile @ XW_slab, epilogue on the last k step
# ----------------------------------------------------------------------------
def _accumulate(a_ref, xw_ref, acc_ref, *, tk, xw_resident):
    k = pl.program_id(1)

    @pl.when(k == 0)
    def _():
        acc_ref[...] = jnp.zeros_like(acc_ref)

    # int8 A_hat storage (halves HBM traffic); upcast to bf16 for the MXU.
    a = a_ref[...].astype(jnp.bfloat16)
    if xw_resident:
        off = pl.multiple_of(k * tk, tk)
        xw = xw_ref[pl.ds(off, tk), :]     # XW is fully resident in VMEM
    else:
        xw = xw_ref[...]                   # streamed k-slab
    acc_ref[...] += jnp.dot(a, xw, preferred_element_type=jnp.float32)


def _agg_relu_w2_kernel(a_ref, xw_ref, b_ref, w2_ref, o_ref, acc_ref, *,
                        tk, xw_resident):
    """Layer 1: XW2 = relu(A_hat @ XW1 + b1) @ W2 (layer-2 transform fused)."""
    _accumulate(a_ref, xw_ref, acc_ref, tk=tk, xw_resident=xw_resident)

    @pl.when(pl.program_id(1) == pl.num_programs(1) - 1)
    def _():
        h = acc_ref[...] * _A_INV_SCALE + b_ref[...]   # dequant + bias (f32)
        h = jnp.maximum(h, 0.0)                        # relu
        # TODO(synk): F.dropout(training=self.training) is identity in eval
        # mode; training-mode dropout (p=0.5) would mask `h` here via
        # pltpu.prng_seed / pltpu.prng_random_bits.
        o_ref[...] = jnp.dot(h.astype(jnp.bfloat16), w2_ref[...],
                             preferred_element_type=jnp.float32
                             ).astype(o_ref.dtype)


def _agg_logsoftmax_kernel(a_ref, xw_ref, b_ref, o_ref, acc_ref, *,
                           tk, xw_resident, valid_cols):
    """Layer 2: log_softmax(A_hat @ XW2 + b2) with padded lanes masked out."""
    _accumulate(a_ref, xw_ref, acc_ref, tk=tk, xw_resident=xw_resident)

    @pl.when(pl.program_id(1) == pl.num_programs(1) - 1)
    def _():
        h = acc_ref[...] * _A_INV_SCALE + b_ref[...]
        col = lax.broadcasted_iota(jnp.int32, h.shape, dimension=1)
        mask = col < valid_cols
        h = jnp.where(mask, h, -jnp.inf)
        m = jnp.max(h, axis=-1, keepdims=True)
        s = h - m
        lse = jnp.log(jnp.sum(jnp.exp(s), axis=-1, keepdims=True))
        o_ref[...] = jnp.where(mask, s - lse, 0.0).astype(o_ref.dtype)


def _xw_spec(xw, tk):
    n_pad, fout_pad = xw.shape
    resident = (xw.size * xw.dtype.itemsize) <= _XW_RESIDENT_BYTES
    if resident:
        spec = pl.BlockSpec((n_pad, fout_pad), lambda i, k: (0, 0))
    else:
        spec = pl.BlockSpec((tk, fout_pad), lambda i, k: (k, 0))
    return spec, resident


def _agg_layer1(a_q, xw1, b1, w2, *, tm, tk, vmem_limit):
    n_pad = a_q.shape[0]
    hid_pad = xw1.shape[1]
    out_pad = w2.shape[1]
    xw_spec, resident = _xw_spec(xw1, tk)
    kernel = functools.partial(_agg_relu_w2_kernel, tk=tk, xw_resident=resident)
    return pl.pallas_call(
        kernel,
        out_shape=jax.ShapeDtypeStruct((n_pad, out_pad), jnp.bfloat16),
        grid=(n_pad // tm, n_pad // tk),
        in_specs=[
            pl.BlockSpec((tm, tk), lambda i, k: (i, k)),             # A_hat (int8)
            xw_spec,                                                 # XW1 (bf16)
            pl.BlockSpec((1, hid_pad), lambda i, k: (0, 0)),         # b1 (f32)
            pl.BlockSpec((hid_pad, out_pad), lambda i, k: (0, 0)),   # W2 (bf16)
        ],
        out_specs=pl.BlockSpec((tm, out_pad), lambda i, k: (i, 0)),
        scratch_shapes=[pltpu.VMEM((tm, hid_pad), jnp.float32)],
        compiler_params=pltpu.CompilerParams(
            dimension_semantics=("parallel", "arbitrary"),
            vmem_limit_bytes=vmem_limit,
        ),
    )(a_q, xw1, b1, w2)


def _agg_layer2(a_q, xw2, b2, *, tm, tk, vmem_limit, valid_cols):
    n_pad = a_q.shape[0]
    out_pad = xw2.shape[1]
    xw_spec, resident = _xw_spec(xw2, tk)
    kernel = functools.partial(_agg_logsoftmax_kernel, tk=tk,
                               xw_resident=resident, valid_cols=valid_cols)
    return pl.pallas_call(
        kernel,
        out_shape=jax.ShapeDtypeStruct((n_pad, out_pad), jnp.float32),
        grid=(n_pad // tm, n_pad // tk),
        in_specs=[
            pl.BlockSpec((tm, tk), lambda i, k: (i, k)),         # A_hat (int8)
            xw_spec,                                             # XW2 (bf16)
            pl.BlockSpec((1, out_pad), lambda i, k: (0, 0)),     # b2 (f32)
        ],
        out_specs=pl.BlockSpec((tm, out_pad), lambda i, k: (i, 0)),
        scratch_shapes=[pltpu.VMEM((tm, out_pad), jnp.float32)],
        compiler_params=pltpu.CompilerParams(
            dimension_semantics=("parallel", "arbitrary"),
            vmem_limit_bytes=vmem_limit,
        ),
    )(a_q, xw2, b2)


# ----------------------------------------------------------------------------
# plain-JAX glue: normalized adjacency (built at padded size), params, forward
# ----------------------------------------------------------------------------
def build_norm_adj_int8(edge_index, num_nodes, n_pad):
    """int8-quantized D^-1/2 (A + I) D^-1/2, built directly at padded size.

    Values lie in [0, 1], so a fixed scale of 127 is loss-bounded; the
    aggregation kernels multiply the f32 accumulator by 1/127 in the epilogue.
    Padded rows/columns stay exactly zero.
    """
    src, dst = edge_index[0], edge_index[1]
    a = jnp.zeros((n_pad, n_pad), jnp.float32)
    a = a.at[dst, src].set(1.0)                       # message j -> i at A[i, j]
    idx = jnp.arange(num_nodes)
    a = a.at[idx, idx].set(1.0)                       # self loops (valid rows only)
    deg = jnp.sum(a, axis=1)
    d_inv_sqrt = jnp.where(deg > 0, lax.rsqrt(jnp.maximum(deg, 1.0)), 0.0)
    a = d_inv_sqrt[:, None] * a * d_inv_sqrt[None, :]
    return jnp.round(a * _A_SCALE).astype(jnp.int8)


def init_params(key, in_channels, hidden_channels, out_channels):
    k1, k2 = jax.random.split(key)

    def glorot(k, fan_in, fan_out):
        limit = jnp.sqrt(6.0 / (fan_in + fan_out))
        return jax.random.uniform(k, (fan_in, fan_out), jnp.float32, -limit, limit)

    return {
        "w1": glorot(k1, in_channels, hidden_channels),
        "b1": jnp.zeros((1, hidden_channels), jnp.float32),
        "w2": glorot(k2, hidden_channels, out_channels),
        "b2": jnp.zeros((1, out_channels), jnp.float32),
    }


def gcn_forward(params, x, edge_index):
    n, fin = x.shape
    hid = params["w1"].shape[1]
    out = params["w2"].shape[1]

    n_pad, tm, tk = _plan_tiles(n)
    fin_pad = _round_up(fin, 128)
    hid_pad = _round_up(hid, 128)
    out_pad = _round_up(out, 128)
    vmem_limit = _vmem_limit_bytes()

    # int8 normalized adjacency, built once at padded size
    a_q = build_norm_adj_int8(edge_index, n, n_pad)

    x_pad = jnp.pad(x, ((0, n_pad - n), (0, fin_pad - fin))).astype(jnp.bfloat16)
    w1_pad = jnp.pad(params["w1"],
                     ((0, fin_pad - fin), (0, hid_pad - hid))).astype(jnp.bfloat16)
    b1_pad = jnp.pad(params["b1"], ((0, 0), (0, hid_pad - hid)))
    w2_pad = jnp.pad(params["w2"],
                     ((0, hid_pad - hid), (0, out_pad - out))).astype(jnp.bfloat16)
    b2_pad = jnp.pad(params["b2"], ((0, 0), (0, out_pad - out)))

    # ----- layer 1 feature transform: XW1 = X @ W1 -----
    xw1 = _matmul_xw(x_pad, w1_pad, tm=tm, vmem_limit=vmem_limit)

    # ----- layer 1 aggregation fused with layer 2's feature transform:
    #       XW2 = relu(A_hat @ XW1 + b1) @ W2   (dropout is identity in eval) -----
    xw2 = _agg_layer1(a_q, xw1, b1_pad, w2_pad, tm=tm, tk=tk,
                      vmem_limit=vmem_limit)

    # ----- layer 2 aggregation + masked log_softmax -----
    logp = _agg_layer2(a_q, xw2, b2_pad, tm=tm, tk=tk, vmem_limit=vmem_limit,
                       valid_cols=out)
    return logp[:n, :out]


def _gcn_reference(params, x, edge_index):
    """Pure-JAX f32 reference for a loose bf16/int8-tolerance sanity check."""
    n = x.shape[0]
    src, dst = edge_index[0], edge_index[1]
    a = jnp.zeros((n, n), jnp.float32).at[dst, src].set(1.0)
    idx = jnp.arange(n)
    a = a.at[idx, idx].set(1.0)
    deg = jnp.sum(a, axis=1)
    d_inv_sqrt = jnp.where(deg > 0, 1.0 / jnp.sqrt(jnp.maximum(deg, 1.0)), 0.0)
    a_hat = d_inv_sqrt[:, None] * a * d_inv_sqrt[None, :]
    h = jnp.maximum(a_hat @ (x @ params["w1"]) + params["b1"], 0.0)
    z = a_hat @ (h @ params["w2"]) + params["b2"]
    return jax.nn.log_softmax(z, axis=1)


if __name__ == "__main__":
    key = jax.random.PRNGKey(0)
    k_param, k_x = jax.random.split(key)

    num_nodes = 16
    in_channels = 8
    hidden_channels = 32
    out_channels = 8

    # Node features [N, in_channels]
    x = jax.random.normal(k_x, (num_nodes, in_channels), jnp.float32)

    # Deterministic undirected ring graph: edges (i, i+1) in both directions.
    src = jnp.arange(num_nodes, dtype=jnp.int32)
    dst = (src + 1) % num_nodes
    edge_index = jnp.stack(
        [jnp.concatenate([src, dst]), jnp.concatenate([dst, src])], axis=0
    )  # [2, 2N]

    params = init_params(k_param, in_channels, hidden_channels, out_channels)

    out = gcn_forward(params, x, edge_index)
    out = jax.block_until_ready(out)

    assert out.shape == (num_nodes, out_channels)
    # rows of log_softmax should exp-sum to ~1 (epilogue computed in f32 -> tight)
    assert jnp.allclose(jnp.sum(jnp.exp(out), axis=1), 1.0, atol=1e-4)
    # loose comparison against f32 reference (bf16 matmul inputs, int8 A_hat)
    ref = _gcn_reference(params, x, edge_index)
    assert jnp.max(jnp.abs(out - ref)) < 0.25

    print("KERNEL_OK")
</pallas_src>

<mosaic_0001>
module attributes {stable_mosaic.version = 11 : i64} {
  func.func @_xw_kernel(%arg0: i32, %arg1: memref<128x128xbf16, #tpu.memory_space<vmem>>, %arg2: memref<128x128xbf16, #tpu.memory_space<vmem>>, %arg3: memref<128x128xbf16, #tpu.memory_space<vmem>>) attributes {dimension_semantics = [#tpu.dimension_semantics<parallel>], iteration_bounds = array<i64: 1>, scalar_prefetch = 0 : i64, scratch_operands = 0 : i64, tpu.core_type = #tpu.core_type<tc>, window_params = [{transform_indices = @transform_0, window_bounds = array<i64: 128, 128>}, {pipeline_mode = #tpu.pipeline_mode<synchronous>, transform_indices = @transform_1, window_bounds = array<i64: 128, 128>}, {transform_indices = @transform_2, window_bounds = array<i64: 128, 128>}]} {
    %c0 = arith.constant 0 : index
    %c0_0 = arith.constant 0 : index
    %0 = vector.load %arg1[%c0, %c0_0] : memref<128x128xbf16, #tpu.memory_space<vmem>>, vector<128x128xbf16>
    %c0_1 = arith.constant 0 : index
    %c0_2 = arith.constant 0 : index
    %1 = vector.load %arg2[%c0_1, %c0_2] : memref<128x128xbf16, #tpu.memory_space<vmem>>, vector<128x128xbf16>
    %cst = arith.constant dense<0.000000e+00> : vector<128x128xf32>
    %2 = tpu.matmul %0, %1, %cst {dimension_numbers = #tpu.dot_dimension_numbers<[1], [0], [0], [1], [0, 0, 1, 1], [], []>} : vector<128x128xbf16>, vector<128x128xbf16>, vector<128x128xf32> -> vector<128x128xf32>
    %3 = arith.truncf %2 : vector<128x128xf32> to vector<128x128xbf16>
    %c0_3 = arith.constant 0 : index
    %c0_4 = arith.constant 0 : index
    %4 = vector.load %arg3[%c0_3, %c0_4] : memref<128x128xbf16, #tpu.memory_space<vmem>>, vector<128x128xbf16>
    tpu.vector_store %arg3[%c0_3, %c0_4], %3 {strides = array<i32>} : memref<128x128xbf16, #tpu.memory_space<vmem>>, vector<128x128xbf16>,
    return
  }
  func.func @transform_0(%arg0: i32) -> (i32, i32) {
    %c0_i32 = arith.constant 0 : i32
    %c0_i32_0 = arith.constant 0 : i32
    return %arg0, %c0_i32 : i32, i32
  }
  func.func @transform_1(%arg0: i32) -> (i32, i32) {
    %c0_i32 = arith.constant 0 : i32
    %c0_i32_0 = arith.constant 0 : i32
    %c0_i32_1 = arith.constant 0 : i32
    return %c0_i32, %c0_i32_0 : i32, i32
  }
  func.func @transform_2(%arg0: i32) -> (i32, i32) {
    %c0_i32 = arith.constant 0 : i32
    %c0_i32_0 = arith.constant 0 : i32
    return %arg0, %c0_i32 : i32, i32
  }
}

</mosaic_0001>

<llo_original>
// kernel: tpu_custom_call.1
$region0: #{tpu_custom_call.1}
  #allocation0 [shape = 'u32[]', space=smem, size = 0x4, offset = 0x4, fixed_abs, tag = 'smem constant byte address 0x4 - core index']
  #allocation1 [shape = 'u32[144,128]{1,0:T(1,128)}', space=vmem, size = 0x12000, scoped, tag = 'internal scratch']
  %s0 = inlined_call_operand.hbm [shape: bf16[128,128], index: 0, kind: input, shape index: {}]
  %s1 = inlined_call_operand.hbm [shape: bf16[128,128], index: 1, kind: input, shape index: {}]
  %s2 = inlined_call_operand.hbm [shape: bf16[128,128], index: 2, kind: output, shape index: {}]
  %s3 = sld [smem:[#allocation0]]
  $region26: #{tpu_custom_call.1} parent=0
    _
  %s5 = ssub.s32 1, %s3
  %s6 = scalar_select 0, %s5, %s3
  $region1: #{tpu_custom_call.1} parent=0
    #allocation2 [shape = 'u8[32768]{0}', space=vmem, size = 0x8000, scoped, tag = 'input window, operand 0, single buffered']
    #allocation3 [shape = 's32[1]{0}', space=sflag, size = 0x4, scoped, tag = 'scoped memory for tpu_custom_call.1']
    #allocation4 [shape = 's32[1]{0}', space=sflag, size = 0x4, scoped, tag = 'scoped memory for tpu_custom_call.1']
    #allocation5 [shape = 'u8[32768]{0}', space=vmem, size = 0x8000, scoped, tag = 'input window, operand 1, single buffered']
    #allocation6 [shape = 's32[1]{0}', space=sflag, size = 0x4, scoped, tag = 'scoped memory for tpu_custom_call.1']
    #allocation7 [shape = 'u8[32768]{0}', space=vmem, size = 0x8000, scoped, tag = 'output window, operand 0, single buffered']
    %7 = vsyncpa [#allocation3], 0
    %8 = vsyncpa [#allocation6], 0
    %9 = vsyncpa [#allocation4], 0
    // Predicated region
    $region2: #{tpu_custom_call.1} parent=1 // pred_check
      _
    $region3: #{tpu_custom_call.1} parent=1 // pred_check_branch
      %11 = sbr.rel (0) target = $region5
    $region4: #{tpu_custom_call.1} parent=1 // pred_region
      %s13 = ssub.s32 1024, 1024
      %14 = vsyncadd [#allocation3], %s13
      %s15 = sshll.u32 [#allocation2], 4
      %s16 = int_to_ptr.vmem [resolvable:$true] %s15
      %21 = dma.hbm_to_vmem [thread:$0]  %s0, 1024, %s16, [#allocation3], 64, 64, 4
    $region5: #{tpu_custom_call.1} parent=1 // pred_fallthru
      _
    // Predicated region
    $region6: #{tpu_custom_call.1} parent=1 // pred_check
      _
    $region7: #{tpu_custom_call.1} parent=1 // pred_check_branch
      %23 = sbr.rel (0) target = $region9
    $region8: #{tpu_custom_call.1} parent=1 // pred_region
      %s25 = ssub.s32 1024, 1024
      %26 = vsyncadd [#allocation6], %s25
      %s27 = sshll.u32 [#allocation5], 4
      %s28 = int_to_ptr.vmem [resolvable:$true] %s27
      %33 = dma.hbm_to_vmem [thread:$0]  %s1, 1024, %s28, [#allocation6], 64, 64, 4
    $region9: #{tpu_custom_call.1} parent=1 // pred_fallthru
      _
    // Predicated region
    $region10: #{tpu_custom_call.1} parent=1 // pred_check
      _
    $region11: #{tpu_custom_call.1} parent=1 // pred_check_branch
      %35 = sbr.rel (0) target = $region13
    $region12: #{tpu_custom_call.1} parent=1 // pred_region
      %36 = dma.done [#allocation3], 1024
    $region13: #{tpu_custom_call.1} parent=1 // pred_fallthru
      _
    // Predicated region
    $region14: #{tpu_custom_call.1} parent=1 // pred_check
      _
    $region15: #{tpu_custom_call.1} parent=1 // pred_check_branch
      %38 = sbr.rel (0) target = $region17
    $region16: #{tpu_custom_call.1} parent=1 // pred_region
      %39 = dma.done [#allocation6], 1024
    $region17: #{tpu_custom_call.1} parent=1 // pred_fallthru
      _
    %v41 = vld [vmem:[#allocation2] sm:$0xf]
    %v42 = vld [vmem:[#allocation2 + $0x4] sm:$0xf]
    %v43 = vld [vmem:[#allocation2 + $0x8] sm:$0xf]
    %v44 = vld [vmem:[#allocation2 + $0xc] sm:$0xf]
    %v45 = vld [vmem:[#allocation2 + $0x10] sm:$0xf]
    %v46 = vld [vmem:[#allocation2 + $0x14] sm:$0xf]
    %v47 = vld [vmem:[#allocation2 + $0x18] sm:$0xf]
    %v48 = vld [vmem:[#allocation2 + $0x1c] sm:$0xf]
    %v49 = vld [vmem:[#allocation2 + $0x20] sm:$0xf]
    %v50 = vld [vmem:[#allocation2 + $0x24] sm:$0xf]
    %v51 = vld [vmem:[#allocation2 + $0x28] sm:$0xf]
    %v52 = vld [vmem:[#allocation2 + $0x2c] sm:$0xf]
    %v53 = vld [vmem:[#allocation2 + $0x30] sm:$0xf]
    %v54 = vld [vmem:[#allocation2 + $0x34] sm:$0xf]
    %v55 = vld [vmem:[#allocation2 + $0x38] sm:$0xf]
    %v56 = vld [vmem:[#allocation2 + $0x3c] sm:$0xf]
    %v57 = vld [vmem:[#allocation5] sm:$0xf]
    %v58 = vld [vmem:[#allocation5 + $0x4] sm:$0xf]
    %v59 = vld [vmem:[#allocation5 + $0x8] sm:$0xf]
    %v60 = vld [vmem:[#allocation5 + $0xc] sm:$0xf]
    %v61 = vld [vmem:[#allocation5 + $0x10] sm:$0xf]
    %v62 = vld [vmem:[#allocation5 + $0x14] sm:$0xf]
    %v63 = vld [vmem:[#allocation5 + $0x18] sm:$0xf]
    %v64 = vld [vmem:[#allocation5 + $0x1c] sm:$0xf]
    %v65 = vld [vmem:[#allocation5 + $0x20] sm:$0xf]
    %v66 = vld [vmem:[#allocation5 + $0x24] sm:$0xf]
    %v67 = vld [vmem:[#allocation5 + $0x28] sm:$0xf]
    %v68 = vld [vmem:[#allocation5 + $0x2c] sm:$0xf]
    %v69 = vld [vmem:[#allocation5 + $0x30] sm:$0xf]
    %v70 = vld [vmem:[#allocation5 + $0x34] sm:$0xf]
    %v71 = vld [vmem:[#allocation5 + $0x38] sm:$0xf]
    %v72 = vld [vmem:[#allocation5 + $0x3c] sm:$0xf]
    %v89 = vunpack.c.l.b16 %v41
    %v90 = vunpack.c.l.b16 %v42
    %v91 = vunpack.c.l.b16 %v43
    %v92 = vunpack.c.l.b16 %v44
    %v93 = vunpack.c.l.b16 %v45
    %v94 = vunpack.c.l.b16 %v46
    %v95 = vunpack.c.l.b16 %v47
    %v96 = vunpack.c.l.b16 %v48
    %v97 = vunpack.c.l.b16 %v49
    %v98 = vunpack.c.l.b16 %v50
    %v99 = vunpack.c.l.b16 %v51
    %v100 = vunpack.c.l.b16 %v52
    %v101 = vunpack.c.l.b16 %v53
    %v102 = vunpack.c.l.b16 %v54
    %v103 = vunpack.c.l.b16 %v55
    %v104 = vunpack.c.l.b16 %v56
    %v105 = vpack.c.b16 %v90, %v89
    %v106 = vpack.c.b16 %v92, %v91
    %v107 = vpack.c.b16 %v94, %v93
    %v108 = vpack.c.b16 %v96, %v95
    %v109 = vpack.c.b16 %v98, %v97
    %v110 = vpack.c.b16 %v100, %v99
    %v111 = vpack.c.b16 %v102, %v101
    %v112 = vpack.c.b16 %v104, %v103
    %v137 = vunpack.c.l.b16 %v57
    %v138 = vunpack.c.l.b16 %v58
    %v139 = vunpack.c.l.b16 %v59
    %v140 = vunpack.c.l.b16 %v60
    %v141 = vunpack.c.l.b16 %v61
    %v142 = vunpack.c.l.b16 %v62
    %v143 = vunpack.c.l.b16 %v63
    %v144 = vunpack.c.l.b16 %v64
    %v145 = vunpack.c.l.b16 %v65
    %v146 = vunpack.c.l.b16 %v66
    %v147 = vunpack.c.l.b16 %v67
    %v148 = vunpack.c.l.b16 %v68
    %v149 = vunpack.c.l.b16 %v69
    %v150 = vunpack.c.l.b16 %v70
    %v151 = vunpack.c.l.b16 %v71
    %v152 = vunpack.c.l.b16 %v72
    %v153 = vpack.c.b16 %v138, %v137
    %v154 = vpack.c.b16 %v140, %v139
    %v155 = vpack.c.b16 %v142, %v141
    %v156 = vpack.c.b16 %v144, %v143
    %v157 = vpack.c.b16 %v146, %v145
    %v158 = vpack.c.b16 %v148, %v147
    %v159 = vpack.c.b16 %v150, %v149
    %v160 = vpack.c.b16 %v152, %v151
    %169 = vmatprep.subr.bf16.mxu0 0
    %170 = vmatpush1.bf16.msra.mxu0 %v153
    %171 = vmatprep.subr.bf16.mxu0 0
    %172 = vmatpush1.bf16.msra.mxu0 %v154
    %173 = vmatprep.subr.bf16.mxu0 0
    %174 = vmatpush1.bf16.msra.mxu0 %v155
    %175 = vmatprep.subr.bf16.mxu0 0
    %176 = vmatpush1.bf16.msra.mxu0 %v156
    %177 = vmatprep.subr.bf16.mxu0 0
    %178 = vmatpush1.bf16.msra.mxu0 %v157
    %179 = vmatprep.subr.bf16.mxu0 0
    %180 = vmatpush1.bf16.msra.mxu0 %v158
    %181 = vmatprep.subr.bf16.mxu0 0
    %182 = vmatpush1.bf16.msra.mxu0 %v159
    %183 = vmatprep.subr.bf16.mxu0 0
    %184 = vmatpush1.bf16.msra.mxu0 %v160
    %185 = vmatprep.subr.bf16.mxu0 0
    %186 = vmatpush1.bf16.msra.mxu0 0
    %187 = vmatprep.subr.bf16.mxu0 0
    %188 = vmatpush1.bf16.msra.mxu0 0
    %189 = vmatprep.subr.bf16.mxu0 0
    %190 = vmatpush1.bf16.msra.mxu0 0
    %191 = vmatprep.subr.bf16.mxu0 0
    %192 = vmatpush1.bf16.msra.mxu0 0
    %193 = vmatprep.subr.bf16.mxu0 0
    %194 = vmatpush1.bf16.msra.mxu0 0
    %195 = vmatprep.subr.bf16.mxu0 0
    %196 = vmatpush1.bf16.msra.mxu0 0
    %197 = vmatprep.subr.bf16.mxu0 0
    %198 = vmatpush1.bf16.msra.mxu0 0
    %199 = vmatprep.subr.bf16.mxu0 0
    %200 = vmatpush1.bf16.msra.mxu0 0
    %201 = vmatprep.mubr.bf16.mxu0 0
    %202 = vmatmul.mubr.bf16.gmra.mrb[0].mxu0 %v105
    %v203 = vpop.f32.mrb[0].mxu0
    %v204 = vadd.f32 0.0, %v203
    %v205 = vpop.f32.mrb[0].mxu0
    %v206 = vpop.f32.mrb[0].mxu0
    %v207 = vadd.f32 0.0, %v206
    %v208 = vpop.f32.mrb[0].mxu0
    %209 = vmatprep.mubr.bf16.mxu0 0
    %210 = vmatmul.mubr.bf16.gmra.mrb[0].mxu0 %v106
    %v211 = vpop.f32.mrb[0].mxu0
    %v212 = vadd.f32 0.0, %v211
    %v213 = vpop.f32.mrb[0].mxu0
    %v214 = vpop.f32.mrb[0].mxu0
    %v215 = vadd.f32 0.0, %v214
    %v216 = vpop.f32.mrb[0].mxu0
    %217 = vmatprep.mubr.bf16.mxu0 0
    %218 = vmatmul.mubr.bf16.gmra.mrb[0].mxu0 %v107
    %v219 = vpop.f32.mrb[0].mxu0
    %v220 = vadd.f32 0.0, %v219
    %v221 = vpop.f32.mrb[0].mxu0
    %v222 = vpop.f32.mrb[0].mxu0
    %v223 = vadd.f32 0.0, %v222
    %v224 = vpop.f32.mrb[0].mxu0
    %225 = vmatprep.mubr.bf16.mxu0 0
    %226 = vmatmul.mubr.bf16.gmra.mrb[0].mxu0 %v108
    %v227 = vpop.f32.mrb[0].mxu0
    %v228 = vadd.f32 0.0, %v227
    %v229 = vpop.f32.mrb[0].mxu0
    %v230 = vpop.f32.mrb[0].mxu0
    %v231 = vadd.f32 0.0, %v230
    %v232 = vpop.f32.mrb[0].mxu0
    %233 = vmatprep.mubr.bf16.mxu0 0
    %234 = vmatmul.mubr.bf16.gmra.mrb[0].mxu0 %v109
    %v235 = vpop.f32.mrb[0].mxu0
    %v236 = vadd.f32 0.0, %v235
    %v237 = vpop.f32.mrb[0].mxu0
    %v238 = vpop.f32.mrb[0].mxu0
    %v239 = vadd.f32 0.0, %v238
    %v240 = vpop.f32.mrb[0].mxu0
    %241 = vmatprep.mubr.bf16.mxu0 0
    %242 = vmatmul.mubr.bf16.gmra.mrb[0].mxu0 %v110
    %v243 = vpop.f32.mrb[0].mxu0
    %v244 = vadd.f32 0.0, %v243
    %v245 = vpop.f32.mrb[0].mxu0
    %v246 = vpop.f32.mrb[0].mxu0
    %v247 = vadd.f32 0.0, %v246
    %v248 = vpop.f32.mrb[0].mxu0
    %249 = vmatprep.mubr.bf16.mxu0 0
    %250 = vmatmul.mubr.bf16.gmra.mrb[0].mxu0 %v111
    %v251 = vpop.f32.mrb[0].mxu0
    %v252 = vadd.f32 0.0, %v251
    %v253 = vpop.f32.mrb[0].mxu0
    %v254 = vpop.f32.mrb[0].mxu0
    %v255 = vadd.f32 0.0, %v254
    %v256 = vpop.f32.mrb[0].mxu0
    %257 = vmatprep.mubr.bf16.mxu0 0
    %258 = vmatmul.mubr.bf16.gmra.mrb[0].mxu0 %v112
    %v259 = vpop.f32.mrb[0].mxu0
    %v260 = vadd.f32 0.0, %v259
    %v261 = vpop.f32.mrb[0].mxu0
    %v262 = vpop.f32.mrb[0].mxu0
    %v263 = vadd.f32 0.0, %v262
    %v264 = vpop.f32.mrb[0].mxu0
    %265 = vdwg.mxu0
    %v266 = vpack.c.bf16 %v207, %v204
    %v267 = vpack.c.bf16 %v215, %v212
    %v268 = vpack.c.bf16 %v223, %v220
    %v269 = vpack.c.bf16 %v231, %v228
    %v270 = vpack.c.bf16 %v239, %v236
    %v271 = vpack.c.bf16 %v247, %v244
    %v272 = vpack.c.bf16 %v255, %v252
    %v273 = vpack.c.bf16 %v263, %v260
    %v282 = vunpack.c.l.b16 %v266
    %v283 = vunpack.c.h.b16 %v266
    %v284 = vunpack.c.l.b16 %v267
    %v285 = vunpack.c.h.b16 %v267
    %v286 = vunpack.c.l.b16 %v268
    %v287 = vunpack.c.h.b16 %v268
    %v288 = vunpack.c.l.b16 %v269
    %v289 = vunpack.c.h.b16 %v269
    %v290 = vunpack.c.l.b16 %v270
    %v291 = vunpack.c.h.b16 %v270
    %v292 = vunpack.c.l.b16 %v271
    %v293 = vunpack.c.h.b16 %v271
    %v294 = vunpack.c.l.b16 %v272
    %v295 = vunpack.c.h.b16 %v272
    %v296 = vunpack.c.l.b16 %v273
    %v297 = vunpack.c.h.b16 %v273
    %v298 = vpack.c.b16 %v282, %v282
    %v299 = vpack.c.b16 %v283, %v283
    %v300 = vpack.c.b16 %v284, %v284
    %v301 = vpack.c.b16 %v285, %v285
    %v302 = vpack.c.b16 %v286, %v286
    %v303 = vpack.c.b16 %v287, %v287
    %v304 = vpack.c.b16 %v288, %v288
    %v305 = vpack.c.b16 %v289, %v289
    %v306 = vpack.c.b16 %v290, %v290
    %v307 = vpack.c.b16 %v291, %v291
    %v308 = vpack.c.b16 %v292, %v292
    %v309 = vpack.c.b16 %v293, %v293
    %v310 = vpack.c.b16 %v294, %v294
    %v311 = vpack.c.b16 %v295, %v295
    %v312 = vpack.c.b16 %v296, %v296
    %v313 = vpack.c.b16 %v297, %v297
    %330 = vst [vmem:[#allocation7] sm:$0xf] %v298
    %331 = vst [vmem:[#allocation7 + $0x4] sm:$0xf] %v299
    %332 = vst [vmem:[#allocation7 + $0x8] sm:$0xf] %v300
    %333 = vst [vmem:[#allocation7 + $0xc] sm:$0xf] %v301
    %334 = vst [vmem:[#allocation7 + $0x10] sm:$0xf] %v302
    %335 = vst [vmem:[#allocation7 + $0x14] sm:$0xf] %v303
    %336 = vst [vmem:[#allocation7 + $0x18] sm:$0xf] %v304
    %337 = vst [vmem:[#allocation7 + $0x1c] sm:$0xf] %v305
    %338 = vst [vmem:[#allocation7 + $0x20] sm:$0xf] %v306
    %339 = vst [vmem:[#allocation7 + $0x24] sm:$0xf] %v307
    %340 = vst [vmem:[#allocation7 + $0x28] sm:$0xf] %v308
    %341 = vst [vmem:[#allocation7 + $0x2c] sm:$0xf] %v309
    %342 = vst [vmem:[#allocation7 + $0x30] sm:$0xf] %v310
    %343 = vst [vmem:[#allocation7 + $0x34] sm:$0xf] %v311
    %344 = vst [vmem:[#allocation7 + $0x38] sm:$0xf] %v312
    %345 = vst [vmem:[#allocation7 + $0x3c] sm:$0xf] %v313
    // Predicated region
    $region18: #{tpu_custom_call.1} parent=1 // pred_check
      _
    $region19: #{tpu_custom_call.1} parent=1 // pred_check_branch
      %347 = sbr.rel (0) target = $region21
    $region20: #{tpu_custom_call.1} parent=1 // pred_region
      %s349 = ssub.s32 1024, 1024
      %350 = vsyncadd [#allocation4], %s349
      %s351 = sshll.u32 [#allocation7], 4
      %s352 = int_to_ptr.vmem [resolvable:$true] %s351
      %357 = dma.vmem_to_hbm [thread:$0]  %s352, 1024, %s2, [#allocation4], 64, 64, 4
    $region21: #{tpu_custom_call.1} parent=1 // pred_fallthru
      _
    // Predicated region
    $region22: #{tpu_custom_call.1} parent=1 // pred_check
      _
    $region23: #{tpu_custom_call.1} parent=1 // pred_check_branch
      %359 = sbr.rel (0) target = $region25
    $region24: #{tpu_custom_call.1} parent=1 // pred_region
      %360 = dma.done [#allocation4], 1024
    $region25: #{tpu_custom_call.1} parent=1 // pred_fallthru
      _
    %361 = vsyncpa [#allocation3], 1
    %362 = vsyncpa [#allocation6], 1
    %363 = vsyncpa [#allocation4], 1

</llo_original>
